<compile_context>
chip_gen: v7x
topology: tpu7x:2x2x1
jax: 0.10.0
libtpu: 0.0.40
codegen_flags: <defaults>
</compile_context>

<pallas_src>
import functools

import jax
import jax.numpy as jnp
from jax.experimental import pallas as pl
from jax.experimental.pallas import tpu as pltpu

_LANE = 128
_TILE_N_CAP = 1024  # rows per node tile (feedback: bigger tiles amortize per-step overhead)


def _round_up(x, m):
    return (x + m - 1) // m * m


def _vmem_limit(tile_n, Din, Hp, Dout, mm_isz, z2_isz):
    """Rough per-step VMEM need; only raise the scoped default when needed."""
    est = 2 * tile_n * Din * 4                          # h tiles (double-buffered)
    est += 2 * tile_n * Dout * max(z2_isz, 4)           # z2 / output tiles
    est += 2 * ((Din + Dout) * Hp * mm_isz + Hp * 4)    # weights + b1
    est += 2 * tile_n * Hp * 4                          # z1 / a1 temporaries
    if 2 * est <= (12 << 20):                           # fits every chip's default
        return None
    return min(2 * est, 60 << 20)                       # stay under v7x 64 MiB VMEM


# -----------------------------------------------------------------------------
# Fully fused path (single tile): MLP -> global BN stats -> BN + ReLU, one call.
# -----------------------------------------------------------------------------
def _fused_kernel(h_ref, w1_ref, b1_ref, w2_ref, gamma_ref, beta_ref, o_ref,
                  *, n_valid, eps, matmul_dtype):
    h = h_ref[...].astype(matmul_dtype)
    z1 = jnp.dot(h, w1_ref[...], preferred_element_type=jnp.float32) + b1_ref[...]
    a1 = jnp.maximum(z1, 0.0).astype(matmul_dtype)
    z2 = jnp.dot(a1, w2_ref[...], preferred_element_type=jnp.float32)
    # NOTE: b2 intentionally omitted: training-mode BatchNorm subtracts the batch
    # mean of z2, so a constant per-feature shift cancels exactly.

    # Global (whole-batch) BN statistics; mask zero-padded tail rows.
    row = jax.lax.broadcasted_iota(jnp.int32, (z2.shape[0], 1), 0)
    z2m = jnp.where(row < n_valid, z2, 0.0)
    inv_n = 1.0 / float(n_valid)
    mean = jnp.sum(z2m, axis=0, keepdims=True) * inv_n
    var = jnp.maximum(jnp.sum(z2m * z2m, axis=0, keepdims=True) * inv_n
                      - mean * mean, 0.0)               # biased (training-mode)
    scale = gamma_ref[...] * jax.lax.rsqrt(var + eps)
    shift = beta_ref[...] - mean * scale
    o_ref[...] = jnp.maximum(z2 * scale + shift, 0.0).astype(o_ref.dtype)


# -----------------------------------------------------------------------------
# Two-pass path, pass 1: tiled MLP producing z2 (bf16 by default) plus per-tile
# f32 [sum, sumsq] partials so BatchNorm statistics stay global.
# -----------------------------------------------------------------------------
def _mlp_stats_kernel(h_ref, w1_ref, b1_ref, w2_ref, z2_ref, stats_ref,
                      *, n_valid, tile_n, matmul_dtype):
    h = h_ref[...].astype(matmul_dtype)
    z1 = jnp.dot(h, w1_ref[...], preferred_element_type=jnp.float32) + b1_ref[...]
    a1 = jnp.maximum(z1, 0.0).astype(matmul_dtype)
    z2 = jnp.dot(a1, w2_ref[...], preferred_element_type=jnp.float32)
    z2_ref[...] = z2.astype(z2_ref.dtype)

    # Per-tile partial sums for global BN stats; mask rows beyond the real node
    # count (zero-padded tail of the last tile). Single (2, Dout) store.
    row = pl.program_id(0) * tile_n + jax.lax.broadcasted_iota(
        jnp.int32, (tile_n, 1), 0)
    z2m = jnp.where(row < n_valid, z2, 0.0)
    s = jnp.sum(z2m, axis=0, keepdims=True)
    ss = jnp.sum(z2m * z2m, axis=0, keepdims=True)
    stats_ref[0] = jnp.concatenate([s, ss], axis=0)


# -----------------------------------------------------------------------------
# Two-pass path, pass 2: streaming fused BatchNorm (scale*x + shift) + ReLU.
# -----------------------------------------------------------------------------
def _bn_relu_kernel(z_ref, scale_ref, shift_ref, o_ref):
    z = z_ref[...].astype(jnp.float32)
    o_ref[...] = jnp.maximum(z * scale_ref[...] + shift_ref[...],
                             0.0).astype(o_ref.dtype)


def apply_node_func(h, w1, b1, w2, b2, gamma, beta, *,
                    eps=1e-5, matmul_dtype=jnp.float32,
                    z2_dtype=jnp.bfloat16, tile_n_cap=_TILE_N_CAP):
    """h: [N, Din]; returns ReLU(BatchNorm1d(MLP(h))) of shape [N, Dout]."""
    del b2  # cancelled exactly by training-mode BatchNorm mean subtraction
    # TODO(synk): an eval-mode / running-stats BN path would need b2 reinstated.

    N, Din = h.shape
    Din_w, H = w1.shape
    H_w, Dout = w2.shape
    assert Din == Din_w and H == H_w

    # Pad the hidden dim to a lane-dense multiple of 128. Exact: padded columns
    # of a1 are relu(0 + 0) = 0 and hit zero rows of padded w2. H only lives in
    # VMEM, so this adds no activation HBM traffic.
    Hp = _round_up(H, _LANE)
    b1 = jnp.asarray(b1, jnp.float32).reshape(1, H)
    if Hp != H:
        w1 = jnp.pad(w1, ((0, 0), (0, Hp - H)))
        b1 = jnp.pad(b1, ((0, 0), (0, Hp - H)))
        w2 = jnp.pad(w2, ((0, Hp - H), (0, 0)))
    w1 = w1.astype(matmul_dtype)
    w2 = w2.astype(matmul_dtype)
    gamma = jnp.asarray(gamma, jnp.float32).reshape(1, Dout)
    beta = jnp.asarray(beta, jnp.float32).reshape(1, Dout)

    mm_isz = jnp.dtype(matmul_dtype).itemsize
    # Lane-dense epilogue possible when Dout divides 128.
    lane_dense2 = (Dout < _LANE) and (_LANE % Dout == 0)
    row_mult = max(8, (8 * _LANE) // Dout) if lane_dense2 else 8

    # ------------------------------------------------------------------ fused
    if N <= tile_n_cap:
        # TODO(synk): on v7x a single grid step leaves one TensorCore idle; the
        # fused path still wins at GraphMAE sizes by removing the z2 round-trip.
        n_pad = _round_up(N, 8)
        h_p = jnp.pad(h, ((0, n_pad - N), (0, 0))) if n_pad != N else h
        kernel = functools.partial(_fused_kernel, n_valid=N, eps=eps,
                                   matmul_dtype=matmul_dtype)
        flops = 2 * n_pad * (Din * Hp + Hp * Dout) + 8 * n_pad * Dout
        bytes_acc = (n_pad * Din * h.dtype.itemsize
                     + (Din * Hp + Hp * Dout) * mm_isz + Hp * 4 + 4 * Dout * 4
                     + n_pad * Dout * h.dtype.itemsize)
        out = pl.pallas_call(
            kernel,
            out_shape=jax.ShapeDtypeStruct((n_pad, Dout), h.dtype),
            grid=(1,),
            in_specs=[
                pl.BlockSpec((n_pad, Din), lambda i: (0, 0)),
                pl.BlockSpec((Din, Hp), lambda i: (0, 0)),
                pl.BlockSpec((1, Hp), lambda i: (0, 0)),
                pl.BlockSpec((Hp, Dout), lambda i: (0, 0)),
                pl.BlockSpec((1, Dout), lambda i: (0, 0)),
                pl.BlockSpec((1, Dout), lambda i: (0, 0)),
            ],
            out_specs=pl.BlockSpec((n_pad, Dout), lambda i: (0, 0)),
            compiler_params=pltpu.CompilerParams(
                dimension_semantics=("arbitrary",),
                vmem_limit_bytes=_vmem_limit(n_pad, Din, Hp, Dout, mm_isz, 4)),
            cost_estimate=pl.CostEstimate(
                flops=flops, transcendentals=Dout, bytes_accessed=bytes_acc),
        )(h_p, w1, b1, w2, gamma, beta)
        return out[:N] if n_pad != N else out

    # --------------------------------------------------------------- two-pass
    num_tiles = pl.cdiv(N, tile_n_cap)
    tile_n = _round_up(pl.cdiv(N, num_tiles), row_mult)    # balanced tiles
    num_tiles = pl.cdiv(N, tile_n)
    n_pad = num_tiles * tile_n
    h_p = jnp.pad(h, ((0, n_pad - N), (0, 0))) if n_pad != N else h

    kernel1 = functools.partial(_mlp_stats_kernel, n_valid=N, tile_n=tile_n,
                                matmul_dtype=matmul_dtype)
    z2_isz = jnp.dtype(z2_dtype).itemsize
    flops1 = 2 * n_pad * (Din * Hp + Hp * Dout)
    bytes1 = (n_pad * Din * h.dtype.itemsize
              + (Din * Hp + Hp * Dout) * mm_isz + Hp * 4
              + n_pad * Dout * z2_isz + num_tiles * 2 * Dout * 4)

    z2, stats = pl.pallas_call(
        kernel1,
        out_shape=(jax.ShapeDtypeStruct((n_pad, Dout), z2_dtype),
                   jax.ShapeDtypeStruct((num_tiles, 2, Dout), jnp.float32)),
        grid=(num_tiles,),
        in_specs=[
            pl.BlockSpec((tile_n, Din), lambda i: (i, 0)),
            pl.BlockSpec((Din, Hp), lambda i: (0, 0)),   # resident weights
            pl.BlockSpec((1, Hp), lambda i: (0, 0)),     # resident
            pl.BlockSpec((Hp, Dout), lambda i: (0, 0)),  # resident
        ],
        out_specs=(
            pl.BlockSpec((tile_n, Dout), lambda i: (i, 0)),
            pl.BlockSpec((1, 2, Dout), lambda i: (i, 0, 0)),
        ),
        compiler_params=pltpu.CompilerParams(
            dimension_semantics=("parallel",),
            vmem_limit_bytes=_vmem_limit(tile_n, Din, Hp, Dout, mm_isz, z2_isz)),
        cost_estimate=pl.CostEstimate(
            flops=flops1, transcendentals=0, bytes_accessed=bytes1),
    )(h_p, w1, b1, w2)

    # Finalize global BatchNorm statistics in plain JAX (tiny [Dout] work), then
    # fold gamma/beta/mean/var into a single scale & shift.
    # TODO(synk): E[x^2]-mean^2 in f32 can lose precision for very large N with
    # |mean| >> std; switch to a Chan/Welford combine of centered partials then.
    tot = jnp.sum(stats, axis=0)                        # [2, Dout]
    mean = tot[0] / N
    var = jnp.maximum(tot[1] / N - mean * mean, 0.0)    # biased (training-mode)
    scale = gamma * jax.lax.rsqrt(var + eps)            # [1, Dout]
    shift = beta - mean * scale                         # [1, Dout]

    bn_cparams = pltpu.CompilerParams(dimension_semantics=("parallel",))
    bn_cost = pl.CostEstimate(
        flops=2 * n_pad * Dout, transcendentals=0,
        bytes_accessed=n_pad * Dout * (z2_isz + h.dtype.itemsize) + 8 * _LANE)

    if lane_dense2:
        # Lane-dense epilogue: view the row-major z2 buffer as [R, 128] (free,
        # contiguous) and tile scale/shift across 128 lanes -> unmasked stores.
        rep = _LANE // Dout
        tr = (tile_n * Dout) // _LANE                   # rows per flattened tile
        R = num_tiles * tr
        z2v = z2.reshape(R, _LANE)
        scale_v = jnp.tile(scale, (1, rep))
        shift_v = jnp.tile(shift, (1, rep))
        out_flat = pl.pallas_call(
            _bn_relu_kernel,
            out_shape=jax.ShapeDtypeStruct((R, _LANE), h.dtype),
            grid=(num_tiles,),
            in_specs=[
                pl.BlockSpec((tr, _LANE), lambda i: (i, 0)),
                pl.BlockSpec((1, _LANE), lambda i: (0, 0)),
                pl.BlockSpec((1, _LANE), lambda i: (0, 0)),
            ],
            out_specs=pl.BlockSpec((tr, _LANE), lambda i: (i, 0)),
            compiler_params=bn_cparams,
            cost_estimate=bn_cost,
        )(z2v, scale_v, shift_v)
        out = out_flat.reshape(n_pad, Dout)
    else:
        out = pl.pallas_call(
            _bn_relu_kernel,
            out_shape=jax.ShapeDtypeStruct((n_pad, Dout), h.dtype),
            grid=(num_tiles,),
            in_specs=[
                pl.BlockSpec((tile_n, Dout), lambda i: (i, 0)),
                pl.BlockSpec((1, Dout), lambda i: (0, 0)),
                pl.BlockSpec((1, Dout), lambda i: (0, 0)),
            ],
            out_specs=pl.BlockSpec((tile_n, Dout), lambda i: (i, 0)),
            compiler_params=bn_cparams,
            cost_estimate=bn_cost,
        )(z2, scale, shift)

    return out[:N] if n_pad != N else out


def _reference(h, w1, b1, w2, b2, gamma, beta, eps=1e-5):
    z1 = jnp.maximum(h @ w1 + b1, 0.0)
    z2 = z1 @ w2 + b2
    mean = jnp.mean(z2, axis=0, keepdims=True)
    var = jnp.mean((z2 - mean) ** 2, axis=0, keepdims=True)
    bn = gamma * (z2 - mean) / jnp.sqrt(var + eps) + beta
    return jnp.maximum(bn, 0.0)


if __name__ == "__main__":
    # Small shapes consistent with the module: N=16 nodes, Din=32, H=64, Dout=32.
    N, Din, H, Dout = 16, 32, 64, 32
    key = jax.random.PRNGKey(0)
    k_h, k_w1, k_b1, k_w2, k_b2, k_g, k_b, k_h2 = jax.random.split(key, 8)

    h = jax.random.normal(k_h, (N, Din), dtype=jnp.float32)
    w1 = jax.random.normal(k_w1, (Din, H), dtype=jnp.float32) * 0.1
    b1 = jax.random.normal(k_b1, (1, H), dtype=jnp.float32) * 0.1
    w2 = jax.random.normal(k_w2, (H, Dout), dtype=jnp.float32) * 0.1
    b2 = jax.random.normal(k_b2, (1, Dout), dtype=jnp.float32) * 0.1
    gamma = 1.0 + 0.05 * jax.random.normal(k_g, (1, Dout), dtype=jnp.float32)
    beta = 0.05 * jax.random.normal(k_b, (1, Dout), dtype=jnp.float32)

    # 1) Fused single-call path (N fits one tile): full f32, tight tolerance.
    out = jax.block_until_ready(apply_node_func(h, w1, b1, w2, b2, gamma, beta))
    ref = _reference(h, w1, b1, w2, b2, gamma, beta)
    assert out.shape == (N, Dout)
    assert jnp.allclose(out, ref, atol=1e-4, rtol=1e-4), \
        float(jnp.max(jnp.abs(out - ref)))

    # 2) Two-pass path (multi-tile, masked last tile, lane-dense epilogue), f32 z2.
    N2 = 100
    h2 = jax.random.normal(k_h2, (N2, Din), dtype=jnp.float32)
    out2 = jax.block_until_ready(apply_node_func(
        h2, w1, b1, w2, b2, gamma, beta, tile_n_cap=32, z2_dtype=jnp.float32))
    ref2 = _reference(h2, w1, b1, w2, b2, gamma, beta)
    assert out2.shape == (N2, Dout)
    assert jnp.allclose(out2, ref2, atol=1e-4, rtol=1e-4), \
        float(jnp.max(jnp.abs(out2 - ref2)))

    # 3) Two-pass path with the default bf16 z2 intermediate (looser tolerance).
    out3 = jax.block_until_ready(apply_node_func(
        h2, w1, b1, w2, b2, gamma, beta, tile_n_cap=32))
    assert out3.shape == (N2, Dout)
    assert jnp.allclose(out3, ref2, atol=2e-2, rtol=2e-2), \
        float(jnp.max(jnp.abs(out3 - ref2)))

    print("KERNEL_OK")
</pallas_src>

<mosaic_0001>
module attributes {stable_mosaic.version = 11 : i64} {
  func.func @_fused_kernel(%arg0: i32, %arg1: memref<16x32xf32, #tpu.memory_space<vmem>>, %arg2: memref<32x128xf32, #tpu.memory_space<vmem>>, %arg3: memref<1x128xf32, #tpu.memory_space<vmem>>, %arg4: memref<128x32xf32, #tpu.memory_space<vmem>>, %arg5: memref<1x32xf32, #tpu.memory_space<vmem>>, %arg6: memref<1x32xf32, #tpu.memory_space<vmem>>, %arg7: memref<16x32xf32, #tpu.memory_space<vmem>>) attributes {dimension_semantics = [#tpu.dimension_semantics<arbitrary>], iteration_bounds = array<i64: 1>, scalar_prefetch = 0 : i64, scratch_operands = 0 : i64, tpu.core_type = #tpu.core_type<tc>, window_params = [{pipeline_mode = #tpu.pipeline_mode<synchronous>, transform_indices = @transform_0, window_bounds = array<i64: 16, 32>}, {pipeline_mode = #tpu.pipeline_mode<synchronous>, transform_indices = @transform_1, window_bounds = array<i64: 32, 128>}, {pipeline_mode = #tpu.pipeline_mode<synchronous>, transform_indices = @transform_2, window_bounds = array<i64: 1, 128>}, {pipeline_mode = #tpu.pipeline_mode<synchronous>, transform_indices = @transform_3, window_bounds = array<i64: 128, 32>}, {pipeline_mode = #tpu.pipeline_mode<synchronous>, transform_indices = @transform_4, window_bounds = array<i64: 1, 32>}, {pipeline_mode = #tpu.pipeline_mode<synchronous>, transform_indices = @transform_5, window_bounds = array<i64: 1, 32>}, {pipeline_mode = #tpu.pipeline_mode<synchronous>, transform_indices = @transform_6, window_bounds = array<i64: 16, 32>}]} {
    %c0 = arith.constant 0 : index
    %c0_0 = arith.constant 0 : index
    %0 = vector.load %arg1[%c0, %c0_0] : memref<16x32xf32, #tpu.memory_space<vmem>>, vector<16x32xf32>
    %c0_1 = arith.constant 0 : index
    %c0_2 = arith.constant 0 : index
    %1 = vector.load %arg2[%c0_1, %c0_2] : memref<32x128xf32, #tpu.memory_space<vmem>>, vector<32x128xf32>
    %cst = arith.constant dense<0.000000e+00> : vector<16x128xf32>
    %2 = tpu.matmul %0, %1, %cst {dimension_numbers = #tpu.dot_dimension_numbers<[1], [0], [0], [1], [0, 0, 1, 1], [], []>} : vector<16x32xf32>, vector<32x128xf32>, vector<16x128xf32> -> vector<16x128xf32>
    %c0_3 = arith.constant 0 : index
    %c0_4 = arith.constant 0 : index
    %3 = vector.load %arg3[%c0_3, %c0_4] : memref<1x128xf32, #tpu.memory_space<vmem>>, vector<1x128xf32>
    %4 = vector.broadcast %3 : vector<1x128xf32> to vector<16x128xf32>
    %5 = arith.addf %2, %4 : vector<16x128xf32>
    %cst_5 = arith.constant 0.000000e+00 : f32
    %6 = vector.broadcast %cst_5 : f32 to vector<16x128xf32>
    %7 = arith.maximumf %5, %6 : vector<16x128xf32>
    %c0_6 = arith.constant 0 : index
    %c0_7 = arith.constant 0 : index
    %8 = vector.load %arg4[%c0_6, %c0_7] : memref<128x32xf32, #tpu.memory_space<vmem>>, vector<128x32xf32>
    %cst_8 = arith.constant dense<0.000000e+00> : vector<16x32xf32>
    %9 = tpu.matmul %7, %8, %cst_8 {dimension_numbers = #tpu.dot_dimension_numbers<[1], [0], [0], [1], [0, 0, 1, 1], [], []>} : vector<16x128xf32>, vector<128x32xf32>, vector<16x32xf32> -> vector<16x32xf32>
    %10 = tpu.iota {dimensions = array<i32: 0>} : vector<16x1xi32>
    %c16_i32 = arith.constant 16 : i32
    %11 = vector.broadcast %c16_i32 : i32 to vector<16x1xi32>
    %12 = arith.cmpi slt, %10, %11 : vector<16x1xi32>
    %cst_9 = arith.constant 0.000000e+00 : f32
    %13 = vector.shape_cast %12 : vector<16x1xi1> to vector<16x1xi1>
    %14 = vector.broadcast %13 : vector<16x1xi1> to vector<16x32xi1>
    %15 = vector.broadcast %cst_9 : f32 to vector<16x32xf32>
    %16 = arith.select %14, %9, %15 : vector<16x32xi1>, vector<16x32xf32>
    %cst_10 = arith.constant dense<0.000000e+00> : vector<32xf32>
    %17 = vector.multi_reduction <add>, %16, %cst_10 [0] : vector<16x32xf32> to vector<32xf32>
    %18 = vector.shape_cast %17 : vector<32xf32> to vector<1x32xf32>
    %cst_11 = arith.constant 6.250000e-02 : f32
    %19 = vector.broadcast %cst_11 : f32 to vector<1x32xf32>
    %20 = arith.mulf %18, %19 : vector<1x32xf32>
    %21 = arith.mulf %16, %16 : vector<16x32xf32>
    %cst_12 = arith.constant dense<0.000000e+00> : vector<32xf32>
    %22 = vector.multi_reduction <add>, %21, %cst_12 [0] : vector<16x32xf32> to vector<32xf32>
    %23 = vector.shape_cast %22 : vector<32xf32> to vector<1x32xf32>
    %cst_13 = arith.constant 6.250000e-02 : f32
    %24 = vector.broadcast %cst_13 : f32 to vector<1x32xf32>
    %25 = arith.mulf %23, %24 : vector<1x32xf32>
    %26 = arith.mulf %20, %20 : vector<1x32xf32>
    %27 = arith.subf %25, %26 : vector<1x32xf32>
    %cst_14 = arith.constant 0.000000e+00 : f32
    %28 = vector.broadcast %cst_14 : f32 to vector<1x32xf32>
    %29 = arith.maximumf %27, %28 : vector<1x32xf32>
    %c0_15 = arith.constant 0 : index
    %c0_16 = arith.constant 0 : index
    %30 = vector.load %arg5[%c0_15, %c0_16] : memref<1x32xf32, #tpu.memory_space<vmem>>, vector<1x32xf32>
    %cst_17 = arith.constant 9.99999974E-6 : f32
    %31 = vector.broadcast %cst_17 : f32 to vector<1x32xf32>
    %32 = arith.addf %29, %31 : vector<1x32xf32>
    %33 = math.rsqrt %32 : vector<1x32xf32>
    %34 = arith.mulf %30, %33 : vector<1x32xf32>
    %c0_18 = arith.constant 0 : index
    %c0_19 = arith.constant 0 : index
    %35 = vector.load %arg6[%c0_18, %c0_19] : memref<1x32xf32, #tpu.memory_space<vmem>>, vector<1x32xf32>
    %36 = arith.mulf %20, %34 : vector<1x32xf32>
    %37 = arith.subf %35, %36 : vector<1x32xf32>
    %38 = vector.broadcast %34 : vector<1x32xf32> to vector<16x32xf32>
    %39 = arith.mulf %9, %38 : vector<16x32xf32>
    %40 = vector.broadcast %37 : vector<1x32xf32> to vector<16x32xf32>
    %41 = arith.addf %39, %40 : vector<16x32xf32>
    %cst_20 = arith.constant 0.000000e+00 : f32
    %42 = vector.broadcast %cst_20 : f32 to vector<16x32xf32>
    %43 = arith.maximumf %41, %42 : vector<16x32xf32>
    %c0_21 = arith.constant 0 : index
    %c0_22 = arith.constant 0 : index
    %44 = vector.load %arg7[%c0_21, %c0_22] : memref<16x32xf32, #tpu.memory_space<vmem>>, vector<16x32xf32>
    tpu.vector_store %arg7[%c0_21, %c0_22], %43 {strides = array<i32>} : memref<16x32xf32, #tpu.memory_space<vmem>>, vector<16x32xf32>,
    return
  }
  func.func @transform_0(%arg0: i32) -> (i32, i32) {
    %c0_i32 = arith.constant 0 : i32
    %c0_i32_0 = arith.constant 0 : i32
    %c0_i32_1 = arith.constant 0 : i32
    return %c0_i32, %c0_i32_0 : i32, i32
  }
  func.func @transform_1(%arg0: i32) -> (i32, i32) {
    %c0_i32 = arith.constant 0 : i32
    %c0_i32_0 = arith.constant 0 : i32
    %c0_i32_1 = arith.constant 0 : i32
    return %c0_i32, %c0_i32_0 : i32, i32
  }
  func.func @transform_2(%arg0: i32) -> (i32, i32) {
    %c0_i32 = arith.constant 0 : i32
    %c0_i32_0 = arith.constant 0 : i32
    %c0_i32_1 = arith.constant 0 : i32
    return %c0_i32, %c0_i32_0 : i32, i32
  }
  func.func @transform_3(%arg0: i32) -> (i32, i32) {
    %c0_i32 = arith.constant 0 : i32
    %c0_i32_0 = arith.constant 0 : i32
    %c0_i32_1 = arith.constant 0 : i32
    return %c0_i32, %c0_i32_0 : i32, i32
  }
  func.func @transform_4(%arg0: i32) -> (i32, i32) {
    %c0_i32 = arith.constant 0 : i32
    %c0_i32_0 = arith.constant 0 : i32
    %c0_i32_1 = arith.constant 0 : i32
    return %c0_i32, %c0_i32_0 : i32, i32
  }
  func.func @transform_5(%arg0: i32) -> (i32, i32) {
    %c0_i32 = arith.constant 0 : i32
    %c0_i32_0 = arith.constant 0 : i32
    %c0_i32_1 = arith.constant 0 : i32
    return %c0_i32, %c0_i32_0 : i32, i32
  }
  func.func @transform_6(%arg0: i32) -> (i32, i32) {
    %c0_i32 = arith.constant 0 : i32
    %c0_i32_0 = arith.constant 0 : i32
    %c0_i32_1 = arith.constant 0 : i32
    return %c0_i32, %c0_i32_0 : i32, i32
  }
}

</mosaic_0001>

<llo_original>
// kernel: tpu_custom_call.1
$region0: #{tpu_custom_call.1}
  #allocation0 [shape = 'u32[]', space=smem, size = 0x4, offset = 0x4, fixed_abs, tag = 'smem constant byte address 0x4 - core index']
  #allocation1 [shape = 'u32[144,128]{1,0:T(1,128)}', space=vmem, size = 0x12000, scoped, tag = 'internal scratch']
  %s0 = inlined_call_operand.vmem [shape: f32[16,32], index: 0, kind: input, shape index: {}]
  %s1 = inlined_call_operand.vmem [shape: f32[32,128], index: 1, kind: input, shape index: {}]
  %s2 = inlined_call_operand.vmem [shape: f32[1,128], index: 2, kind: input, shape index: {}]
  %s3 = inlined_call_operand.vmem [shape: f32[128,32], index: 3, kind: input, shape index: {}]
  %s4 = inlined_call_operand.vmem [shape: f32[1,32], index: 4, kind: input, shape index: {}]
  %s5 = inlined_call_operand.vmem [shape: f32[1,32], index: 5, kind: input, shape index: {}]
  %s6 = inlined_call_operand.hbm [shape: f32[16,32], index: 6, kind: output, shape index: {}]
  %s7 = sld [smem:[#allocation0]]
  $region34: #{tpu_custom_call.1} parent=0
    _
  %s9 = ssub.s32 1, %s7
  %s10 = scalar_select 0, %s9, %s7
  $region1: #{tpu_custom_call.1} parent=0
    #allocation2 [shape = 'u8[8192]{0}', space=vmem, size = 0x2000, scoped, tag = 'output window, operand 0, single buffered']
    #allocation3 [shape = 's32[1]{0}', space=sflag, size = 0x4, scoped, tag = 'scoped memory for tpu_custom_call.1']
    %11 = vsyncpa [#allocation3], 0
    // Predicated region
    $region2: #{tpu_custom_call.1} parent=1 // pred_check
      _
    $region3: #{tpu_custom_call.1} parent=1 // pred_check_branch
      %13 = sbr.rel (0) target = $region5
    $region4: #{tpu_custom_call.1} parent=1 // pred_region
      _
    $region5: #{tpu_custom_call.1} parent=1 // pred_fallthru
      _
    // Predicated region
    $region6: #{tpu_custom_call.1} parent=1 // pred_check
      _
    $region7: #{tpu_custom_call.1} parent=1 // pred_check_branch
      %15 = sbr.rel (0) target = $region9
    $region8: #{tpu_custom_call.1} parent=1 // pred_region
      _
    $region9: #{tpu_custom_call.1} parent=1 // pred_fallthru
      _
    // Predicated region
    $region10: #{tpu_custom_call.1} parent=1 // pred_check
      _
    $region11: #{tpu_custom_call.1} parent=1 // pred_check_branch
      %17 = sbr.rel (0) target = $region13
    $region12: #{tpu_custom_call.1} parent=1 // pred_region
      _
    $region13: #{tpu_custom_call.1} parent=1 // pred_fallthru
      _
    // Predicated region
    $region14: #{tpu_custom_call.1} parent=1 // pred_check
      _
    $region15: #{tpu_custom_call.1} parent=1 // pred_check_branch
      %19 = sbr.rel (0) target = $region17
    $region16: #{tpu_custom_call.1} parent=1 // pred_region
      _
    $region17: #{tpu_custom_call.1} parent=1 // pred_fallthru
      _
    // Predicated region
    $region18: #{tpu_custom_call.1} parent=1 // pred_check
      _
    $region19: #{tpu_custom_call.1} parent=1 // pred_check_branch
      %21 = sbr.rel (0) target = $region21
    $region20: #{tpu_custom_call.1} parent=1 // pred_region
      _
    $region21: #{tpu_custom_call.1} parent=1 // pred_fallthru
      _
    // Predicated region
    $region22: #{tpu_custom_call.1} parent=1 // pred_check
      _
    $region23: #{tpu_custom_call.1} parent=1 // pred_check_branch
      %23 = sbr.rel (0) target = $region25
    $region24: #{tpu_custom_call.1} parent=1 // pred_region
      _
    $region25: #{tpu_custom_call.1} parent=1 // pred_fallthru
      _
    %v24 = vld [vmem:[%s0] sm:$0xff]
    %v25 = vld [vmem:[%s0 + $0x8] sm:$0xff]
    %v26 = vld [vmem:[%s1] sm:$0xff]
    %v27 = vld [vmem:[%s1 + $0x8] sm:$0xff]
    %v28 = vld [vmem:[%s1 + $0x10] sm:$0xff]
    %v29 = vld [vmem:[%s1 + $0x18] sm:$0xff]
    %v30 = vld [vmem:[%s2] sm:$0x1]
    %v32 = vlaneseq
    %v33 = vshrl.u32 %v32, 7
    %v34 = vsub.s32 0, %v33
    %v35 = vrot.slane %v30, %v34
    %vm37 = vcmask 261120
    %v39 = vsel %vm37, %v24, 0
    %v42 = vsel %vm37, %v25, 0
    %44 = vmatprep.subr.mxu0 0.0
    %45 = vmatpush1.msra.mxu0 %v26
    %46 = vmatprep.subr.mxu0 0.0
    %47 = vmatpush1.msra.mxu0 %v27
    %48 = vmatprep.subr.mxu0 0.0
    %49 = vmatpush1.msra.mxu0 %v28
    %50 = vmatprep.subr.mxu0 0.0
    %51 = vmatpush1.msra.mxu0 %v29
    %52 = vmatprep.subr.mxu0 0.0
    %53 = vmatpush1.msra.mxu0 0.0
    %54 = vmatprep.subr.mxu0 0.0
    %55 = vmatpush1.msra.mxu0 0.0
    %56 = vmatprep.subr.mxu0 0.0
    %57 = vmatpush1.msra.mxu0 0.0
    %58 = vmatprep.subr.mxu0 0.0
    %59 = vmatpush1.msra.mxu0 0.0
    %60 = vmatprep.subr.mxu0 0.0
    %61 = vmatpush1.msra.mxu0 0.0
    %62 = vmatprep.subr.mxu0 0.0
    %63 = vmatpush1.msra.mxu0 0.0
    %64 = vmatprep.subr.mxu0 0.0
    %65 = vmatpush1.msra.mxu0 0.0
    %66 = vmatprep.subr.mxu0 0.0
    %67 = vmatpush1.msra.mxu0 0.0
    %68 = vmatprep.subr.mxu0 0.0
    %69 = vmatpush1.msra.mxu0 0.0
    %70 = vmatprep.subr.mxu0 0.0
    %71 = vmatpush1.msra.mxu0 0.0
    %72 = vmatprep.subr.mxu0 0.0
    %73 = vmatpush1.msra.mxu0 0.0
    %74 = vmatprep.subr.mxu0 0.0
    %75 = vmatpush1.msra.mxu0 0.0
    %76 = vmatprep.subr.mxu0 0.0
    %77 = vmatpush1.msra.mxu0 0.0
    %78 = vmatprep.subr.mxu0 0.0
    %79 = vmatpush1.msra.mxu0 0.0
    %80 = vmatprep.subr.mxu0 0.0
    %81 = vmatpush1.msra.mxu0 0.0
    %82 = vmatprep.subr.mxu0 0.0
    %83 = vmatpush1.msra.mxu0 0.0
    %84 = vmatprep.subr.mxu0 0.0
    %85 = vmatpush1.msra.mxu0 0.0
    %86 = vmatprep.subr.mxu0 0.0
    %87 = vmatpush1.msra.mxu0 0.0
    %88 = vmatprep.subr.mxu0 0.0
    %89 = vmatpush1.msra.mxu0 0.0
    %90 = vmatprep.subr.mxu0 0.0
    %91 = vmatpush1.msra.mxu0 0.0
    %92 = vmatprep.subr.mxu0 0.0
    %93 = vmatpush1.msra.mxu0 0.0
    %94 = vmatprep.subr.mxu0 0.0
    %95 = vmatpush1.msra.mxu0 0.0
    %96 = vmatprep.subr.mxu0 0.0
    %97 = vmatpush1.msra.mxu0 0.0
    %98 = vmatprep.subr.mxu0 0.0
    %99 = vmatpush1.msra.mxu0 0.0
    %100 = vmatprep.subr.mxu0 0.0
    %101 = vmatpush1.msra.mxu0 0.0
    %102 = vmatprep.subr.mxu0 0.0
    %103 = vmatpush1.msra.mxu0 0.0
    %104 = vmatprep.subr.mxu0 0.0
    %105 = vmatpush1.msra.mxu0 0.0
    %106 = vmatprep.subr.mxu0 0.0
    %107 = vmatpush1.msra.mxu0 0.0
    %108 = vmatprep.mubr.f32.mxu0 0.0
    %109 = vmatmul.mubr.f32.gmra.mrb[0].mxu0 %v39
    %v110 = vpop.f32.mrb[0].mxu0
    %v111 = vadd.f32 %v35, %v110
    %v112 = vpop.f32.mrb[0].mxu0
    %113 = vmatprep.mubr.f32.mxu0 0.0
    %114 = vmatmul.mubr.f32.gmra.mrb[0].mxu0 %v42
    %v115 = vpop.f32.mrb[0].mxu0
    %v116 = vadd.f32 %v35, %v115
    %v117 = vpop.f32.mrb[0].mxu0
    %118 = vdwg.mxu0
    %v119 = vmax.f32 %v111, 0.0
    %v120 = vmax.f32 %v116, 0.0
    %v121 = vld [vmem:[%s3] sm:$0xff]
    %v122 = vld [vmem:[%s3 + $0x8] sm:$0xff]
    %v123 = vld [vmem:[%s3 + $0x10] sm:$0xff]
    %v124 = vld [vmem:[%s3 + $0x18] sm:$0xff]
    %v125 = vld [vmem:[%s3 + $0x20] sm:$0xff]
    %v126 = vld [vmem:[%s3 + $0x28] sm:$0xff]
    %v127 = vld [vmem:[%s3 + $0x30] sm:$0xff]
    %v128 = vld [vmem:[%s3 + $0x38] sm:$0xff]
    %v129 = vld [vmem:[%s3 + $0x40] sm:$0xff]
    %v130 = vld [vmem:[%s3 + $0x48] sm:$0xff]
    %v131 = vld [vmem:[%s3 + $0x50] sm:$0xff]
    %v132 = vld [vmem:[%s3 + $0x58] sm:$0xff]
    %v133 = vld [vmem:[%s3 + $0x60] sm:$0xff]
    %v134 = vld [vmem:[%s3 + $0x68] sm:$0xff]
    %v135 = vld [vmem:[%s3 + $0x70] sm:$0xff]
    %v136 = vld [vmem:[%s3 + $0x78] sm:$0xff]
    %137 = vmatprep.subr.mxu0 0.0
    %138 = vmatpush1.msra.mxu0 %v121
    %139 = vmatprep.subr.mxu0 0.0
    %140 = vmatpush1.msra.mxu0 %v122
    %141 = vmatprep.subr.mxu0 0.0
    %142 = vmatpush1.msra.mxu0 %v123
    %143 = vmatprep.subr.mxu0 0.0
    %144 = vmatpush1.msra.mxu0 %v124
    %145 = vmatprep.subr.mxu0 0.0
    %146 = vmatpush1.msra.mxu0 %v125
    %147 = vmatprep.subr.mxu0 0.0
    %148 = vmatpush1.msra.mxu0 %v126
    %149 = vmatprep.subr.mxu0 0.0
    %150 = vmatpush1.msra.mxu0 %v127
    %151 = vmatprep.subr.mxu0 0.0
    %152 = vmatpush1.msra.mxu0 %v128
    %153 = vmatprep.subr.mxu0 0.0
    %154 = vmatpush1.msra.mxu0 %v129
    %155 = vmatprep.subr.mxu0 0.0
    %156 = vmatpush1.msra.mxu0 %v130
    %157 = vmatprep.subr.mxu0 0.0
    %158 = vmatpush1.msra.mxu0 %v131
    %159 = vmatprep.subr.mxu0 0.0
    %160 = vmatpush1.msra.mxu0 %v132
    %161 = vmatprep.subr.mxu0 0.0
    %162 = vmatpush1.msra.mxu0 %v133
    %163 = vmatprep.subr.mxu0 0.0
    %164 = vmatpush1.msra.mxu0 %v134
    %165 = vmatprep.subr.mxu0 0.0
    %166 = vmatpush1.msra.mxu0 %v135
    %167 = vmatprep.subr.mxu0 0.0
    %168 = vmatpush1.msra.mxu0 %v136
    %169 = vmatprep.subr.mxu0 0.0
    %170 = vmatpush1.msra.mxu0 0.0
    %171 = vmatprep.subr.mxu0 0.0
    %172 = vmatpush1.msra.mxu0 0.0
    %173 = vmatprep.subr.mxu0 0.0
    %174 = vmatpush1.msra.mxu0 0.0
    %175 = vmatprep.subr.mxu0 0.0
    %176 = vmatpush1.msra.mxu0 0.0
    %177 = vmatprep.subr.mxu0 0.0
    %178 = vmatpush1.msra.mxu0 0.0
    %179 = vmatprep.subr.mxu0 0.0
    %180 = vmatpush1.msra.mxu0 0.0
    %181 = vmatprep.subr.mxu0 0.0
    %182 = vmatpush1.msra.mxu0 0.0
    %183 = vmatprep.subr.mxu0 0.0
    %184 = vmatpush1.msra.mxu0 0.0
    %185 = vmatprep.subr.mxu0 0.0
    %186 = vmatpush1.msra.mxu0 0.0
    %187 = vmatprep.subr.mxu0 0.0
    %188 = vmatpush1.msra.mxu0 0.0
    %189 = vmatprep.subr.mxu0 0.0
    %190 = vmatpush1.msra.mxu0 0.0
    %191 = vmatprep.subr.mxu0 0.0
    %192 = vmatpush1.msra.mxu0 0.0
    %193 = vmatprep.subr.mxu0 0.0
    %194 = vmatpush1.msra.mxu0 0.0
    %195 = vmatprep.subr.mxu0 0.0
    %196 = vmatpush1.msra.mxu0 0.0
    %197 = vmatprep.subr.mxu0 0.0
    %198 = vmatpush1.msra.mxu0 0.0
    %199 = vmatprep.subr.mxu0 0.0
    %200 = vmatpush1.msra.mxu0 0.0
    %201 = vmatprep.mubr.f32.mxu0 0.0
    %202 = vmatmul.mubr.f32.gmra.mrb[0].mxu0 %v119
    %v203 = vpop.f32.mrb[0].mxu0
    %v204 = vadd.f32 0.0, %v203
    %v205 = vpop.f32.mrb[0].mxu0
    %206 = vmatprep.mubr.f32.mxu0 0.0
    %207 = vmatmul.mubr.f32.gmra.mrb[0].mxu0 %v120
    %v208 = vpop.f32.mrb[0].mxu0
    %v209 = vadd.f32 0.0, %v208
    %v210 = vpop.f32.mrb[0].mxu0
    %211 = vdwg.mxu0
    %v212 = vlaneseq
    %v213 = vshrl.u32 %v212, 7
    %v214 = vadd.s32 %v213, 8
    %vm215 = vcmp.lt.s32.totalorder %v213, 16
    %vm216 = vcmp.lt.s32.totalorder %v214, 16
    %v217 = vsel %vm215, 1, 0
    %v218 = vsel %vm216, 1, 0
    %vm219 = vcmp.eq.s32.totalorder %v217, 1
    %vm220 = vcmp.eq.s32.totalorder %v218, 1
    %v221 = vsel %vm219, %v204, 0.0
    %v222 = vsel %vm220, %v209, 0.0
    %v223 = vsel %vm37, %v221, 0.0
    %v224 = vsel %vm37, %v222, 0.0
    %v225 = vadd.f32 %v223, %v224
    %v226 = vrot.slane %v225, 4
    %v227 = vadd.f32 %v225, %v226
    %v228 = vrot.slane %v227, 2
    %v229 = vadd.f32 %v227, %v228
    %v230 = vrot.slane %v229, 1
    %v231 = vadd.f32 %v229, %v230
    %v232 = vmul.f32 %v231, 0.0625
    %v233 = vmul.f32 %v221, %v221
    %v234 = vmul.f32 %v222, %v222
    %v235 = vsel %vm37, %v233, 0.0
    %v236 = vsel %vm37, %v234, 0.0
    %v237 = vadd.f32 %v235, %v236
    %v238 = vrot.slane %v237, 4
    %v239 = vadd.f32 %v237, %v238
    %v240 = vrot.slane %v239, 2
    %v241 = vadd.f32 %v239, %v240
    %v242 = vrot.slane %v241, 1
    %v243 = vadd.f32 %v241, %v242
    %v244 = vmul.f32 %v243, 0.0625
    %v245 = vmul.f32 %v232, %v232
    %v246 = vsub.f32 %v244, %v245
    %v247 = vmax.f32 %v246, 0.0
    %v248 = vld [vmem:[%s4] sm:$0x1]
    %v249 = vadd.f32 %v247, 1e-05
    %v250 = vrsqrt.pop %v249
    %v251 = vmul.f32 %v248, %v250
    %v252 = vld [vmem:[%s5] sm:$0x1]
    %v253 = vmul.f32 %v232, %v251
    %v254 = vsub.f32 %v252, %v253
    %v256 = vlaneseq
    %v257 = vshrl.u32 %v256, 7
    %v258 = vsub.s32 0, %v257
    %v259 = vrot.slane %v251, %v258
    %v261 = vmul.f32 %v204, %v259
    %v262 = vmul.f32 %v209, %v259
    %v264 = vlaneseq
    %v265 = vshrl.u32 %v264, 7
    %v266 = vsub.s32 0, %v265
    %v267 = vrot.slane %v254, %v266
    %v269 = vadd.f32 %v261, %v267
    %v270 = vadd.f32 %v262, %v267
    %v271 = vmax.f32 %v269, 0.0
    %v272 = vmax.f32 %v270, 0.0
    %273 = vst.msk [vmem:[#allocation2] sm:$0xff] %vm37, %v271
    %274 = vst.msk [vmem:[#allocation2 + $0x8] sm:$0xff] %vm37, %v272
    // Predicated region
    $region26: #{tpu_custom_call.1} parent=1 // pred_check
      _
    $region27: #{tpu_custom_call.1} parent=1 // pred_check_branch
      %276 = sbr.rel (0) target = $region29
    $region28: #{tpu_custom_call.1} parent=1 // pred_region
      %s278 = ssub.s32 256, 256
      %279 = vsyncadd [#allocation3], %s278
      %s280 = sshll.u32 [#allocation2], 4
      %s281 = int_to_ptr.vmem [resolvable:$true] %s280
      %286 = dma.vmem_to_hbm [thread:$0]  %s281, 256, %s6, [#allocation3], 128, 128, 8
    $region29: #{tpu_custom_call.1} parent=1 // pred_fallthru
      _
    // Predicated region
    $region30: #{tpu_custom_call.1} parent=1 // pred_check
      _
    $region31: #{tpu_custom_call.1} parent=1 // pred_check_branch
      %288 = sbr.rel (0) target = $region33
    $region32: #{tpu_custom_call.1} parent=1 // pred_region
      %289 = dma.done [#allocation3], 256
    $region33: #{tpu_custom_call.1} parent=1 // pred_fallthru
      _
    %290 = vsyncpa [#allocation3], 1

</llo_original>
